<compile_context>
chip_gen: v6e
topology: v6e:2x2x1
jax: 0.10.0
libtpu: 0.0.40
codegen_flags: <defaults>
</compile_context>

<pallas_src>
import jax
import jax.numpy as jnp
from jax import lax
from jax.experimental import pallas as pl
from jax.experimental.pallas import tpu as pltpu

_LB = 128                      # lane tile width
_NEG_INF = float("-inf")


def _round_up(a, b):
    return ((a + b - 1) // b) * b


def _make_kernel(C, Ch, S, TS, num_js, n_par):
    """Build the kernel. n_par = number of interleaved (sum,max) accumulator pairs."""
    inv_s = 1.0 / float(S)
    rem = S - (num_js - 1) * TS          # valid lanes in the last spatial block, 1..TS
    has_tail = rem != TS
    chunks_full = TS // _LB              # TS is a multiple of 256 -> even

    def _accumulate(x_ref, sum_acc, max_acc, n_chunks, tail_len):
        # Accumulate `n_chunks` full 128-lane chunks plus an optional masked
        # partial chunk of `tail_len` valid lanes, all static quantities.
        zeros = jnp.zeros((C, _LB), jnp.float32)
        ninf = jnp.full((C, _LB), _NEG_INF, jnp.float32)
        accs = [zeros, ninf] * n_par                      # [s0, m0, (s1, m1)]

        n_iter = n_chunks // n_par

        def body(it, carry):
            accs_l = list(carry)
            base = pl.multiple_of(it * (n_par * _LB), n_par * _LB)
            for a in range(n_par):
                c = x_ref[:, pl.ds(base + a * _LB, _LB)].astype(jnp.float32)
                accs_l[2 * a] = accs_l[2 * a] + c
                accs_l[2 * a + 1] = jnp.maximum(accs_l[2 * a + 1], c)
            return tuple(accs_l)

        if n_iter > 0:
            accs = list(lax.fori_loop(0, n_iter, body, tuple(accs),
                                      unroll=min(8, n_iter)))

        # Static leftover full chunks (when n_chunks % n_par != 0).
        for k in range(n_iter * n_par, n_chunks):
            c = x_ref[:, k * _LB:(k + 1) * _LB].astype(jnp.float32)
            accs[0] = accs[0] + c
            accs[1] = jnp.maximum(accs[1], c)

        # Masked partial chunk at the end of this block (tail_len < 128 lanes).
        if tail_len:
            k = n_chunks
            c = x_ref[:, k * _LB:(k + 1) * _LB].astype(jnp.float32)
            lane = lax.broadcasted_iota(jnp.int32, (C, _LB), 1)
            valid = lane < tail_len
            accs[0] = accs[0] + jnp.where(valid, c, 0.0)
            accs[1] = jnp.maximum(accs[1], jnp.where(valid, c, _NEG_INF))

        s, m = accs[0], accs[1]
        for a in range(1, n_par):
            s = s + accs[2 * a]
            m = jnp.maximum(m, accs[2 * a + 1])
        sum_acc[...] = sum_acc[...] + s
        max_acc[...] = jnp.maximum(max_acc[...], m)

    def kernel(x_ref, w1t_ref, b1_ref, w2_ref, b2_ref, o_ref, sum_acc, max_acc):
        js = pl.program_id(1)

        @pl.when(js == 0)
        def _():
            sum_acc[...] = jnp.zeros_like(sum_acc)
            max_acc[...] = jnp.full_like(max_acc, _NEG_INF)

        if not has_tail:
            _accumulate(x_ref, sum_acc, max_acc, chunks_full, 0)
        else:
            if num_js > 1:
                @pl.when(js < num_js - 1)
                def _():
                    _accumulate(x_ref, sum_acc, max_acc, chunks_full, 0)

            @pl.when(js == num_js - 1)
            def _():
                _accumulate(x_ref, sum_acc, max_acc, rem // _LB, rem % _LB)

        @pl.when(js == num_js - 1)
        def _():
            w1t = w1t_ref[...]                         # (C, Ch) == W1.T
            b1 = b1_ref[...]                           # (1, Ch)
            w2 = w2_ref[...]                           # (C, Ch)
            b2 = b2_ref[...]                           # (C, 1)

            avg = jnp.sum(sum_acc[...], axis=-1, keepdims=True) * inv_s   # (C, 1)
            mx = jnp.max(max_acc[...], axis=-1, keepdims=True)            # (C, 1)

            def fc(v):                                 # (C, 1) -> (C, 1)
                h = jnp.sum(w1t * v, axis=0, keepdims=True) + b1          # (1, Ch)
                h = jnp.maximum(h, 0.0)                                   # ReLU
                return jnp.sum(w2 * h, axis=1, keepdims=True) + b2        # (C, 1)

            out = jax.nn.sigmoid(fc(avg) + fc(mx))                        # (C, 1)
            o_ref[...] = out.astype(o_ref.dtype)

    return kernel


def channel_attention(x, w1, b1, w2, b2):
    """x: (N, C, H, W); w1: (Ch, C); b1: (Ch,); w2: (C, Ch); b2: (C,).
    Returns (N, C, 1, 1) f32 = sigmoid(fc(avgpool(x)) + fc(maxpool(x)))."""
    N, C, H, W = x.shape
    Ch = w1.shape[0]
    S = H * W
    itemsize = x.dtype.itemsize

    # Generation-aware per-block budget for the streamed x tile (double-buffered
    # by the pipeline): ~8 MiB, shrunk if VMEM is small (v7x: 64 MiB physical).
    try:
        info = pltpu.get_tpu_info()
        vmem_bytes = int(getattr(info, "vmem_capacity_bytes", 64 * 1024 * 1024))
    except Exception:  # pragma: no cover - conservative fallback
        vmem_bytes = 64 * 1024 * 1024
    block_budget = min(8 * 1024 * 1024, max(2 * 1024 * 1024, vmem_bytes // 8))

    # Lane-dense spatial tile, multiple of 256 lanes (two 128-lane chunks).
    ts_cap = max(256, (block_budget // (itemsize * C)) // 256 * 256)
    TS = min(ts_cap, _round_up(S, 256))
    num_js = -(-S // TS)                      # cdiv; last block handled by masking
    block_bytes = C * TS * itemsize

    n_par = 2 if C <= 64 else 1               # interleaved accumulator pairs

    x2 = x.reshape(N, C, S)                   # free view; keep input dtype
    w1t = jnp.asarray(w1, jnp.float32).T.reshape(C, Ch)
    b1r = jnp.asarray(b1, jnp.float32).reshape(1, Ch)
    w2a = jnp.asarray(w2, jnp.float32).reshape(C, Ch)
    b2c = jnp.asarray(b2, jnp.float32).reshape(C, 1)

    kernel = _make_kernel(C, Ch, S, TS, num_js, n_par)

    cost = pl.CostEstimate(
        flops=int(2 * N * C * S + 8 * N * C * Ch),
        transcendentals=int(N * C),
        bytes_accessed=int(N * C * S * itemsize + 4 * (2 * C * Ch + Ch + C)
                           + N * C * 4),
    )

    out = pl.pallas_call(
        kernel,
        out_shape=jax.ShapeDtypeStruct((N, C, 1), jnp.float32),
        grid_spec=pltpu.PrefetchScalarGridSpec(
            num_scalar_prefetch=0,
            grid=(N, num_js),
            in_specs=[
                pl.BlockSpec((pl.Squeezed(), C, TS), lambda n, j: (n, 0, j)),
                pl.BlockSpec((C, Ch), lambda n, j: (0, 0)),
                pl.BlockSpec((1, Ch), lambda n, j: (0, 0)),
                pl.BlockSpec((C, Ch), lambda n, j: (0, 0)),
                pl.BlockSpec((C, 1), lambda n, j: (0, 0)),
            ],
            out_specs=pl.BlockSpec((pl.Squeezed(), C, 1), lambda n, j: (n, 0, 0)),
            scratch_shapes=[
                pltpu.VMEM((C, _LB), jnp.float32),   # running channel sums
                pltpu.VMEM((C, _LB), jnp.float32),   # running channel maxes
            ],
        ),
        compiler_params=pltpu.CompilerParams(
            dimension_semantics=("parallel", "arbitrary"),
            vmem_limit_bytes=int(max(32 * 1024 * 1024,
                                     2 * block_bytes + 2 * 1024 * 1024))),
        cost_estimate=cost,
    )(x2, w1t, b1r, w2a, b2c)

    return out.reshape(N, C, 1, 1)


def _reference(x, w1, b1, w2, b2):
    # Pure-JAX reference mirroring the PyTorch module.
    xf = x.astype(jnp.float32)
    avg = jnp.mean(xf, axis=(2, 3))                 # (N, C)
    mx = jnp.max(xf, axis=(2, 3))                   # (N, C)

    def fc(v):
        h = jnp.maximum(v @ w1.T + b1, 0.0)         # (N, Ch)
        return h @ w2.T + b2                        # (N, C)

    out = jax.nn.sigmoid(fc(avg) + fc(mx))
    N, C = out.shape
    return out.reshape(N, C, 1, 1)


def _run_case(key, N, C, H, W):
    kx, kw1, kb1, kw2, kb2 = jax.random.split(key, 5)
    Ch = C // 16                                    # module hardcodes in_planes // 16
    x = jax.random.normal(kx, (N, C, H, W), dtype=jnp.float32)

    bound1 = 1.0 / (C ** 0.5)
    w1 = jax.random.uniform(kw1, (Ch, C), jnp.float32, -bound1, bound1)
    b1 = jax.random.uniform(kb1, (Ch,), jnp.float32, -bound1, bound1)
    bound2 = 1.0 / (Ch ** 0.5)
    w2 = jax.random.uniform(kw2, (C, Ch), jnp.float32, -bound2, bound2)
    b2 = jax.random.uniform(kb2, (C,), jnp.float32, -bound2, bound2)

    out = jax.block_until_ready(channel_attention(x, w1, b1, w2, b2))
    ref = _reference(x, w1, b1, w2, b2)
    assert out.shape == (N, C, 1, 1)
    err = float(jnp.max(jnp.abs(out - ref)))
    assert jnp.allclose(out, ref, atol=2e-5, rtol=1e-4), (N, C, H, W, err)


if __name__ == "__main__":
    key = jax.random.PRNGKey(0)
    k0, k1, k2 = jax.random.split(key, 3)

    # Small canonical case: single full 256-lane block per batch element.
    _run_case(k0, N=2, C=32, H=16, W=16)
    # Odd spatial extent: single partially-masked block (tail path).
    _run_case(k1, N=1, C=64, H=15, W=15)
    # Large image: multiple spatial blocks with a masked tail block
    # (exercises cross-step scratch accumulation).
    _run_case(k2, N=1, C=64, H=200, W=200)

    print("KERNEL_OK")
</pallas_src>

<mosaic_0001>
module attributes {stable_mosaic.version = 11 : i64} {
  func.func @kernel(%arg0: i32, %arg1: i32, %arg2: memref<1x32x256xf32, #tpu.memory_space<vmem>>, %arg3: memref<32x2xf32, #tpu.memory_space<vmem>>, %arg4: memref<1x2xf32, #tpu.memory_space<vmem>>, %arg5: memref<32x2xf32, #tpu.memory_space<vmem>>, %arg6: memref<32x1xf32, #tpu.memory_space<vmem>>, %arg7: memref<1x32x1xf32, #tpu.memory_space<vmem>>, %arg8: memref<32x128xf32, #tpu.memory_space<vmem>>, %arg9: memref<32x128xf32, #tpu.memory_space<vmem>>) attributes {dimension_semantics = [#tpu.dimension_semantics<parallel>, #tpu.dimension_semantics<arbitrary>], iteration_bounds = array<i64: 2, 1>, scalar_prefetch = 0 : i64, scratch_operands = 2 : i64, tpu.core_type = #tpu.core_type<tc>, window_params = [{transform_indices = @transform_0, window_bounds = array<i64: 1, 32, 256>}, {pipeline_mode = #tpu.pipeline_mode<synchronous>, transform_indices = @transform_1, window_bounds = array<i64: 32, 2>}, {pipeline_mode = #tpu.pipeline_mode<synchronous>, transform_indices = @transform_2, window_bounds = array<i64: 1, 2>}, {pipeline_mode = #tpu.pipeline_mode<synchronous>, transform_indices = @transform_3, window_bounds = array<i64: 32, 2>}, {pipeline_mode = #tpu.pipeline_mode<synchronous>, transform_indices = @transform_4, window_bounds = array<i64: 32, 1>}, {transform_indices = @transform_5, window_bounds = array<i64: 1, 32, 1>}]} {
    %c0_i32 = arith.constant 0 : i32
    %0 = arith.cmpi eq, %arg1, %c0_i32 : i32
    %1 = arith.extui %0 : i1 to i32
    %c0_i32_0 = arith.constant 0 : i32
    %2 = arith.cmpi ne, %1, %c0_i32_0 : i32
    scf.if %2 {
      %cst_17 = arith.constant 0.000000e+00 : f32
      %30 = vector.broadcast %cst_17 : f32 to vector<32x128xf32>
      %c0_18 = arith.constant 0 : index
      %c0_19 = arith.constant 0 : index
      %31 = vector.load %arg8[%c0_18, %c0_19] : memref<32x128xf32, #tpu.memory_space<vmem>>, vector<32x128xf32>
      tpu.vector_store %arg8[%c0_18, %c0_19], %30 {strides = array<i32>} : memref<32x128xf32, #tpu.memory_space<vmem>>, vector<32x128xf32>,
      %cst_20 = arith.constant 0xFF800000 : f32
      %32 = vector.broadcast %cst_20 : f32 to vector<32x128xf32>
      %c0_21 = arith.constant 0 : index
      %c0_22 = arith.constant 0 : index
      %33 = vector.load %arg9[%c0_21, %c0_22] : memref<32x128xf32, #tpu.memory_space<vmem>>, vector<32x128xf32>
      tpu.vector_store %arg9[%c0_21, %c0_22], %32 {strides = array<i32>} : memref<32x128xf32, #tpu.memory_space<vmem>>, vector<32x128xf32>,
    } else {
    }
    %cst = arith.constant 0.000000e+00 : f32
    %3 = vector.broadcast %cst : f32 to vector<32x128xf32>
    %cst_1 = arith.constant 0xFF800000 : f32
    %4 = vector.broadcast %cst_1 : f32 to vector<32x128xf32>
    %c0_i32_2 = arith.constant 0 : i32
    %c256_i32 = arith.constant 256 : i32
    %5 = arith.muli %c0_i32_2, %c256_i32 : i32
    %6 = tpu.assume_multiple %5, 256 : i32
    %c0_i32_3 = arith.constant 0 : i32
    %7 = arith.addi %6, %c0_i32_3 : i32
    %c0 = arith.constant 0 : index
    %c0_4 = arith.constant 0 : index
    %8 = arith.index_cast %7 : i32 to index
    %9 = vector.load %arg2[%c0, %c0_4, %8] : memref<1x32x256xf32, #tpu.memory_space<vmem>>, vector<1x32x128xf32>
    %10 = vector.shape_cast %9 : vector<1x32x128xf32> to vector<32x128xf32>
    %11 = arith.addf %3, %10 : vector<32x128xf32>
    %12 = arith.maximumf %4, %10 : vector<32x128xf32>
    %c128_i32 = arith.constant 128 : i32
    %13 = arith.addi %6, %c128_i32 : i32
    %c0_5 = arith.constant 0 : index
    %c0_6 = arith.constant 0 : index
    %14 = arith.index_cast %13 : i32 to index
    %15 = vector.load %arg2[%c0_5, %c0_6, %14] : memref<1x32x256xf32, #tpu.memory_space<vmem>>, vector<1x32x128xf32>
    %16 = vector.shape_cast %15 : vector<1x32x128xf32> to vector<32x128xf32>
    %17 = arith.addf %3, %16 : vector<32x128xf32>
    %18 = arith.maximumf %4, %16 : vector<32x128xf32>
    %c1_i32 = arith.constant 1 : i32
    %19 = arith.addf %11, %17 : vector<32x128xf32>
    %20 = arith.maximumf %12, %18 : vector<32x128xf32>
    %c0_7 = arith.constant 0 : index
    %c0_8 = arith.constant 0 : index
    %21 = vector.load %arg8[%c0_7, %c0_8] : memref<32x128xf32, #tpu.memory_space<vmem>>, vector<32x128xf32>
    %22 = arith.addf %21, %19 : vector<32x128xf32>
    %c0_9 = arith.constant 0 : index
    %c0_10 = arith.constant 0 : index
    %23 = vector.load %arg8[%c0_9, %c0_10] : memref<32x128xf32, #tpu.memory_space<vmem>>, vector<32x128xf32>
    tpu.vector_store %arg8[%c0_9, %c0_10], %22 {strides = array<i32>} : memref<32x128xf32, #tpu.memory_space<vmem>>, vector<32x128xf32>,
    %c0_11 = arith.constant 0 : index
    %c0_12 = arith.constant 0 : index
    %24 = vector.load %arg9[%c0_11, %c0_12] : memref<32x128xf32, #tpu.memory_space<vmem>>, vector<32x128xf32>
    %25 = arith.maximumf %24, %20 : vector<32x128xf32>
    %c0_13 = arith.constant 0 : index
    %c0_14 = arith.constant 0 : index
    %26 = vector.load %arg9[%c0_13, %c0_14] : memref<32x128xf32, #tpu.memory_space<vmem>>, vector<32x128xf32>
    tpu.vector_store %arg9[%c0_13, %c0_14], %25 {strides = array<i32>} : memref<32x128xf32, #tpu.memory_space<vmem>>, vector<32x128xf32>,
    %c0_i32_15 = arith.constant 0 : i32
    %27 = arith.cmpi eq, %arg1, %c0_i32_15 : i32
    %28 = arith.extui %27 : i1 to i32
    %c0_i32_16 = arith.constant 0 : i32
    %29 = arith.cmpi ne, %28, %c0_i32_16 : i32
    scf.if %29 {
      %c0_17 = arith.constant 0 : index
      %c0_18 = arith.constant 0 : index
      %30 = vector.load %arg3[%c0_17, %c0_18] : memref<32x2xf32, #tpu.memory_space<vmem>>, vector<32x2xf32>
      %c0_19 = arith.constant 0 : index
      %c0_20 = arith.constant 0 : index
      %31 = vector.load %arg4[%c0_19, %c0_20] : memref<1x2xf32, #tpu.memory_space<vmem>>, vector<1x2xf32>
      %c0_21 = arith.constant 0 : index
      %c0_22 = arith.constant 0 : index
      %32 = vector.load %arg5[%c0_21, %c0_22] : memref<32x2xf32, #tpu.memory_space<vmem>>, vector<32x2xf32>
      %c0_23 = arith.constant 0 : index
      %c0_24 = arith.constant 0 : index
      %33 = vector.load %arg6[%c0_23, %c0_24] : memref<32x1xf32, #tpu.memory_space<vmem>>, vector<32x1xf32>
      %c0_25 = arith.constant 0 : index
      %c0_26 = arith.constant 0 : index
      %34 = vector.load %arg8[%c0_25, %c0_26] : memref<32x128xf32, #tpu.memory_space<vmem>>, vector<32x128xf32>
      %cst_27 = arith.constant dense<0.000000e+00> : vector<32xf32>
      %35 = vector.multi_reduction <add>, %34, %cst_27 [1] : vector<32x128xf32> to vector<32xf32>
      %36 = vector.shape_cast %35 : vector<32xf32> to vector<32x1xf32>
      %cst_28 = arith.constant 3.906250e-03 : f32
      %37 = vector.broadcast %cst_28 : f32 to vector<32x1xf32>
      %38 = arith.mulf %36, %37 : vector<32x1xf32>
      %c0_29 = arith.constant 0 : index
      %c0_30 = arith.constant 0 : index
      %39 = vector.load %arg9[%c0_29, %c0_30] : memref<32x128xf32, #tpu.memory_space<vmem>>, vector<32x128xf32>
      %cst_31 = arith.constant dense<0xFF800000> : vector<32xf32>
      %40 = vector.multi_reduction <maximumf>, %39, %cst_31 [1] : vector<32x128xf32> to vector<32xf32>
      %41 = vector.shape_cast %40 : vector<32xf32> to vector<32x1xf32>
      %42 = vector.broadcast %38 : vector<32x1xf32> to vector<32x2xf32>
      %43 = arith.mulf %30, %42 : vector<32x2xf32>
      %cst_32 = arith.constant dense<0.000000e+00> : vector<2xf32>
      %44 = vector.multi_reduction <add>, %43, %cst_32 [0] : vector<32x2xf32> to vector<2xf32>
      %45 = vector.shape_cast %44 : vector<2xf32> to vector<1x2xf32>
      %46 = arith.addf %45, %31 : vector<1x2xf32>
      %cst_33 = arith.constant 0.000000e+00 : f32
      %47 = vector.broadcast %cst_33 : f32 to vector<1x2xf32>
      %48 = arith.maximumf %46, %47 : vector<1x2xf32>
      %49 = vector.broadcast %48 : vector<1x2xf32> to vector<32x2xf32>
      %50 = arith.mulf %32, %49 : vector<32x2xf32>
      %cst_34 = arith.constant dense<0.000000e+00> : vector<32xf32>
      %51 = vector.multi_reduction <add>, %50, %cst_34 [1] : vector<32x2xf32> to vector<32xf32>
      %52 = vector.shape_cast %51 : vector<32xf32> to vector<32x1xf32>
      %53 = arith.addf %52, %33 : vector<32x1xf32>
      %54 = vector.broadcast %41 : vector<32x1xf32> to vector<32x2xf32>
      %55 = arith.mulf %30, %54 : vector<32x2xf32>
      %cst_35 = arith.constant dense<0.000000e+00> : vector<2xf32>
      %56 = vector.multi_reduction <add>, %55, %cst_35 [0] : vector<32x2xf32> to vector<2xf32>
      %57 = vector.shape_cast %56 : vector<2xf32> to vector<1x2xf32>
      %58 = arith.addf %57, %31 : vector<1x2xf32>
      %cst_36 = arith.constant 0.000000e+00 : f32
      %59 = vector.broadcast %cst_36 : f32 to vector<1x2xf32>
      %60 = arith.maximumf %58, %59 : vector<1x2xf32>
      %61 = vector.broadcast %60 : vector<1x2xf32> to vector<32x2xf32>
      %62 = arith.mulf %32, %61 : vector<32x2xf32>
      %cst_37 = arith.constant dense<0.000000e+00> : vector<32xf32>
      %63 = vector.multi_reduction <add>, %62, %cst_37 [1] : vector<32x2xf32> to vector<32xf32>
      %64 = vector.shape_cast %63 : vector<32xf32> to vector<32x1xf32>
      %65 = arith.addf %64, %33 : vector<32x1xf32>
      %66 = arith.addf %53, %65 : vector<32x1xf32>
      %67 = arith.negf %66 : vector<32x1xf32>
      %68 = math.exp %67 : vector<32x1xf32>
      %cst_38 = arith.constant 1.000000e+00 : f32
      %69 = vector.broadcast %cst_38 : f32 to vector<32x1xf32>
      %70 = arith.addf %69, %68 : vector<32x1xf32>
      %71 = arith.divf %69, %70 : vector<32x1xf32>
      %c0_39 = arith.constant 0 : index
      %c0_40 = arith.constant 0 : index
      %c0_41 = arith.constant 0 : index
      %72 = vector.load %arg7[%c0_39, %c0_40, %c0_41] : memref<1x32x1xf32, #tpu.memory_space<vmem>>, vector<1x32x1xf32>
      %73 = vector.shape_cast %72 : vector<1x32x1xf32> to vector<32x1xf32>
      %74 = vector.shape_cast %71 : vector<32x1xf32> to vector<1x32x1xf32>
      tpu.vector_store %arg7[%c0_39, %c0_40, %c0_41], %74 {strides = array<i32>} : memref<1x32x1xf32, #tpu.memory_space<vmem>>, vector<1x32x1xf32>,
    } else {
    }
    return
  }
  func.func @transform_0(%arg0: i32, %arg1: i32) -> (i32, i32, i32) {
    %c0_i32 = arith.constant 0 : i32
    %c0_i32_0 = arith.constant 0 : i32
    return %arg0, %c0_i32, %arg1 : i32, i32, i32
  }
  func.func @transform_1(%arg0: i32, %arg1: i32) -> (i32, i32) {
    %c0_i32 = arith.constant 0 : i32
    %c0_i32_0 = arith.constant 0 : i32
    %c0_i32_1 = arith.constant 0 : i32
    return %c0_i32, %c0_i32_0 : i32, i32
  }
  func.func @transform_2(%arg0: i32, %arg1: i32) -> (i32, i32) {
    %c0_i32 = arith.constant 0 : i32
    %c0_i32_0 = arith.constant 0 : i32
    %c0_i32_1 = arith.constant 0 : i32
    return %c0_i32, %c0_i32_0 : i32, i32
  }
  func.func @transform_3(%arg0: i32, %arg1: i32) -> (i32, i32) {
    %c0_i32 = arith.constant 0 : i32
    %c0_i32_0 = arith.constant 0 : i32
    %c0_i32_1 = arith.constant 0 : i32
    return %c0_i32, %c0_i32_0 : i32, i32
  }
  func.func @transform_4(%arg0: i32, %arg1: i32) -> (i32, i32) {
    %c0_i32 = arith.constant 0 : i32
    %c0_i32_0 = arith.constant 0 : i32
    %c0_i32_1 = arith.constant 0 : i32
    return %c0_i32, %c0_i32_0 : i32, i32
  }
  func.func @transform_5(%arg0: i32, %arg1: i32) -> (i32, i32, i32) {
    %c0_i32 = arith.constant 0 : i32
    %c0_i32_0 = arith.constant 0 : i32
    %c0_i32_1 = arith.constant 0 : i32
    return %arg0, %c0_i32, %c0_i32_0 : i32, i32, i32
  }
}

</mosaic_0001>

<llo_original>
// kernel: tpu_custom_call.1
$region0: #{tpu_custom_call.1}
  #allocation0 [shape = 'u32[]', space=smem, size = 0x4, offset = 0x4, fixed_abs, tag = 'smem constant byte address 0x4 - core index']
  #allocation1 [shape = 'u32[144,128]{1,0:T(1,128)}', space=vmem, size = 0x12000, scoped, tag = 'internal scratch']
  #allocation2 [shape = 'f32[32,128]{1,0:T(8,128)}', space=vmem, size = 0x4000, scoped, tag = 'scratch operand']
  #allocation3 [shape = 'f32[32,128]{1,0:T(8,128)}', space=vmem, size = 0x4000, scoped, tag = 'scratch operand']
  %s0 = inlined_call_operand.hbm [shape: f32[2,32,256], index: 0, kind: input, shape index: {}]
  %s1 = inlined_call_operand.vmem [shape: f32[32,2], index: 1, kind: input, shape index: {}]
  %s2 = inlined_call_operand.vmem [shape: f32[1,2], index: 2, kind: input, shape index: {}]
  %s3 = inlined_call_operand.vmem [shape: f32[32,2], index: 3, kind: input, shape index: {}]
  %s4 = inlined_call_operand.vmem [shape: f32[32,1], index: 4, kind: input, shape index: {}]
  %s5 = inlined_call_operand.vmem [shape: f32[2,32,1], index: 5, kind: output, shape index: {}]
  %s6 = sld [smem:[#allocation0]]
  $region65: #{tpu_custom_call.1} parent=0
    _
  %s8 = ssub.s32 1, %s6
  %s9 = scalar_select 0, %s8, %s6
  $region1: #{tpu_custom_call.1} parent=0
    #allocation4 [shape = 'u8[65536]{0}', space=vmem, size = 0x10000, scoped, tag = 'input window, operand 0']
    #allocation5 [shape = 's32[2]{0}', space=sflag, size = 0x8, scoped, tag = 'scoped memory for tpu_custom_call.1']
    %10 = vsyncpa [#allocation5], 0
    %s11 = scalar_lea.sflag [#allocation5], 1
    %12 = vsyncpa %s11, 0
    loop: start=0, step=1, limit=4
    $region2: #{tpu_custom_call.1} parent=1 // loop_pre_header
      _
    $region3: #{tpu_custom_call.1} parent=1 // loop_header
      %s14 = sphi 0, %s18
      %p15 = scmp.ge.s32.totalorder %s14, 4
      %s21 = sphi 0, %s33
      %s22 = sphi 0, %s29
      %s23 = sphi 0, %s21
      %s24 = sphi 0, %s22
      %s25 = sphi 0, %s23
      %s26 = sphi 0, %s24
      %s38 = sphi 0, %s40
      %s41 = sphi 0, %s38
      %s42 = sphi 0, %s41
      %s58 = sphi 0, %s42
      %s62 = sphi 0, %s62
      %s64 = sphi 0, %s62
      %s65 = sphi 0, %s64
      %s79 = sphi 0, %s65
      %s83 = sphi 0, %s83
      %s85 = sphi 0, %s83
      %s86 = sphi 0, %s85
      %s100 = sphi 0, %s86
      %s104 = sphi 0, %s104
      %s106 = sphi 0, %s104
      %s107 = sphi 0, %s106
      %s121 = sphi 0, %s107
      %s125 = sphi 0, %s125
      %s127 = sphi 0, %s125
      %s128 = sphi 0, %s127
      %s142 = sphi 0, %s128
      %s148 = sphi 0, %s150
      %s151 = sphi 0, %s148
      %s152 = sphi 0, %s151
      %s168 = sphi 0, %s152
    $region4: #{tpu_custom_call.1} parent=1 // loop_header_branch
      %17 = sbr.rel (%p15) target = $region8
    $region5: #{tpu_custom_call.1} parent=1 // loop_body
      %s19 = ssub.s32 %s14, 1
      %s20 = ssub.s32 %s14, 2
      %s27 = sadd.s32 1, %s22
      %p28 = scmp.ge.s32.totalorder %s27, 1
      %s29 = scalar_select %p28, 0, %s27
      %s30 = sadd.s32 1, %s21
      %s31 = scalar_select %p28, %s30, %s21
      %p32 = scmp.ge.s32.totalorder %s31, 2
      %s33 = scalar_select %p32, 0, %s31
      %s34 = ssub.s32 %s21, %s33
      %s35 = ssub.s32 %s22, %s29
      %s36 = sor.u32 %s34, %s35
      %p37 = scmp.eq.s32.totalorder %s36, 0
      %s39 = sadd.s32 %s38, 1
      %s40 = scalar_select %p37, %s38, %s39
      %p43 = pneg %p37
      %p44 = scmp.eq.s32.totalorder %s14, 1
      %p45 = por %p43, %p44
      %p46 = scmp.ne.s32.totalorder %s38, %s41
      %p47 = scmp.eq.s32.totalorder %s14, 0
      %p48 = por %p46, %p47
      %p49 = scmp.ne.s32.totalorder %s38, %s41
      %p50 = scmp.eq.s32.totalorder %s19, 1
      %p51 = por %p49, %p50
      %p52 = scmp.ne.s32.totalorder %s41, %s42
      %p53 = scmp.eq.s32.totalorder %s19, 0
      %p54 = por %p52, %p53
      %p55 = scmp.ne.s32.totalorder %s41, %s42
      %p56 = scmp.eq.s32.totalorder %s20, 1
      %p57 = por %p55, %p56
      %p59 = scmp.ne.s32.totalorder %s42, %s58
      %p60 = scmp.eq.s32.totalorder %s20, 0
      %p61 = por %p59, %p60
      %s63 = sadd.s32 %s62, 1
      %p66 = scmp.eq.s32.totalorder %s14, 1
      %p67 = scmp.ne.s32.totalorder %s62, %s64
      %p68 = scmp.eq.s32.totalorder %s14, 0
      %p69 = por %p67, %p68
      %p70 = scmp.ne.s32.totalorder %s62, %s64
      %p71 = scmp.eq.s32.totalorder %s19, 1
      %p72 = por %p70, %p71
      %p73 = scmp.ne.s32.totalorder %s64, %s65
      %p74 = scmp.eq.s32.totalorder %s19, 0
      %p75 = por %p73, %p74
      %p76 = scmp.ne.s32.totalorder %s64, %s65
      %p77 = scmp.eq.s32.totalorder %s20, 1
      %p78 = por %p76, %p77
      %p80 = scmp.ne.s32.totalorder %s65, %s79
      %p81 = scmp.eq.s32.totalorder %s20, 0
      %p82 = por %p80, %p81
      %s84 = sadd.s32 %s83, 1
      %p87 = scmp.eq.s32.totalorder %s14, 1
      %p88 = scmp.ne.s32.totalorder %s83, %s85
      %p89 = scmp.eq.s32.totalorder %s14, 0
      %p90 = por %p88, %p89
      %p91 = scmp.ne.s32.totalorder %s83, %s85
      %p92 = scmp.eq.s32.totalorder %s19, 1
      %p93 = por %p91, %p92
      %p94 = scmp.ne.s32.totalorder %s85, %s86
      %p95 = scmp.eq.s32.totalorder %s19, 0
      %p96 = por %p94, %p95
      %p97 = scmp.ne.s32.totalorder %s85, %s86
      %p98 = scmp.eq.s32.totalorder %s20, 1
      %p99 = por %p97, %p98
      %p101 = scmp.ne.s32.totalorder %s86, %s100
      %p102 = scmp.eq.s32.totalorder %s20, 0
      %p103 = por %p101, %p102
      %s105 = sadd.s32 %s104, 1
      %p108 = scmp.eq.s32.totalorder %s14, 1
      %p109 = scmp.ne.s32.totalorder %s104, %s106
      %p110 = scmp.eq.s32.totalorder %s14, 0
      %p111 = por %p109, %p110
      %p112 = scmp.ne.s32.totalorder %s104, %s106
      %p113 = scmp.eq.s32.totalorder %s19, 1
      %p114 = por %p112, %p113
      %p115 = scmp.ne.s32.totalorder %s106, %s107
      %p116 = scmp.eq.s32.totalorder %s19, 0
      %p117 = por %p115, %p116
      %p118 = scmp.ne.s32.totalorder %s106, %s107
      %p119 = scmp.eq.s32.totalorder %s20, 1
      %p120 = por %p118, %p119
      %p122 = scmp.ne.s32.totalorder %s107, %s121
      %p123 = scmp.eq.s32.totalorder %s20, 0
      %p124 = por %p122, %p123
      %s126 = sadd.s32 %s125, 1
      %p129 = scmp.eq.s32.totalorder %s14, 1
      %p130 = scmp.ne.s32.totalorder %s125, %s127
      %p131 = scmp.eq.s32.totalorder %s14, 0
      %p132 = por %p130, %p131
      %p133 = scmp.ne.s32.totalorder %s125, %s127
      %p134 = scmp.eq.s32.totalorder %s19, 1
      %p135 = por %p133, %p134
      %p136 = scmp.ne.s32.totalorder %s127, %s128
      %p137 = scmp.eq.s32.totalorder %s19, 0
      %p138 = por %p136, %p137
      %p139 = scmp.ne.s32.totalorder %s127, %s128
      %p140 = scmp.eq.s32.totalorder %s20, 1
      %p141 = por %p139, %p140
      %p143 = scmp.ne.s32.totalorder %s128, %s142
      %p144 = scmp.eq.s32.totalorder %s20, 0
      %p145 = por %p143, %p144
      %s146 = ssub.s32 %s21, %s33
      %p147 = scmp.eq.s32.totalorder %s146, 0
      %s149 = sadd.s32 %s148, 1
      %s150 = scalar_select %p147, %s148, %s149
      %p153 = pneg %p147
      %p154 = scmp.eq.s32.totalorder %s14, 1
      %p155 = por %p153, %p154
      %p156 = scmp.ne.s32.totalorder %s148, %s151
      %p157 = scmp.eq.s32.totalorder %s14, 0
      %p158 = por %p156, %p157
      %p159 = scmp.ne.s32.totalorder %s148, %s151
      %p160 = scmp.eq.s32.totalorder %s19, 1
      %p161 = por %p159, %p160
      %p162 = scmp.ne.s32.totalorder %s151, %s152
      %p163 = scmp.eq.s32.totalorder %s19, 0
      %p164 = por %p162, %p163
      %p165 = scmp.ne.s32.totalorder %s151, %s152
      %p166 = scmp.eq.s32.totalorder %s20, 1
      %p167 = por %p165, %p166
      %p169 = scmp.ne.s32.totalorder %s152, %s168
      %p170 = scmp.eq.s32.totalorder %s20, 0
      %p171 = por %p169, %p170
      %p172 = scmp.le.s32.totalorder 1, %s14
      %p173 = scmp.lt.s32.totalorder %s14, 3
      %p174 = pnand %p172, %p173
      %p175 = pneg %p174
      // Predicated region
      $region9: #{tpu_custom_call.1} parent=5 // pred_check
        _
      $region10: #{tpu_custom_call.1} parent=5 // pred_check_branch
        %177 = sbr.rel (%p174) target = $region12
      $region11: #{tpu_custom_call.1} parent=5 // pred_region
        %s178 = ssub.s32 %s14, 1
        // Predicated region
        $region13: #{tpu_custom_call.1} parent=11 // pred_check
          %p179 = pneg %p75
        $region14: #{tpu_custom_call.1} parent=11 // pred_check_branch
          %181 = sbr.rel (%p179) target = $region16
        $region15: #{tpu_custom_call.1} parent=11 // pred_region
          _
        $region16: #{tpu_custom_call.1} parent=11 // pred_fallthru
          _
        // Predicated region
        $region17: #{tpu_custom_call.1} parent=11 // pred_check
          %p182 = pneg %p96
        $region18: #{tpu_custom_call.1} parent=11 // pred_check_branch
          %184 = sbr.rel (%p182) target = $region20
        $region19: #{tpu_custom_call.1} parent=11 // pred_region
          _
        $region20: #{tpu_custom_call.1} parent=11 // pred_fallthru
          _
        // Predicated region
        $region21: #{tpu_custom_call.1} parent=11 // pred_check
          %p185 = pneg %p117
        $region22: #{tpu_custom_call.1} parent=11 // pred_check_branch
          %187 = sbr.rel (%p185) target = $region24
        $region23: #{tpu_custom_call.1} parent=11 // pred_region
          _
        $region24: #{tpu_custom_call.1} parent=11 // pred_fallthru
          _
        // Predicated region
        $region25: #{tpu_custom_call.1} parent=11 // pred_check
          %p188 = pneg %p138
        $region26: #{tpu_custom_call.1} parent=11 // pred_check_branch
          %190 = sbr.rel (%p188) target = $region28
        $region27: #{tpu_custom_call.1} parent=11 // pred_region
          _
        $region28: #{tpu_custom_call.1} parent=11 // pred_fallthru
          _
      $region12: #{tpu_custom_call.1} parent=5 // pred_fallthru
        _
      %p191 = scmp.lt.s32.totalorder %s14, 2
      // Predicated region
      $region29: #{tpu_custom_call.1} parent=5 // pred_check
        %p192 = pneg %p191
      $region30: #{tpu_custom_call.1} parent=5 // pred_check_branch
        %194 = sbr.rel (%p192) target = $region32
      $region31: #{tpu_custom_call.1} parent=5 // pred_region
        // Predicated region
        $region33: #{tpu_custom_call.1} parent=31 // pred_check
          %p195 = pneg %p48
        $region34: #{tpu_custom_call.1} parent=31 // pred_check_branch
          %197 = sbr.rel (%p195) target = $region36
        $region35: #{tpu_custom_call.1} parent=31 // pred_region
          %s198 = sand.u32 %s38, 1
          %s199 = scalar_lea.sflag [#allocation5], %s198
          %s200 = sand.u32 %s38, 1
          %s201 = smul.addr %s200, 64
          %s202 = scalar_lea.vmem [#allocation4], %s201
          %s203 = smul.u32 2, %s22
          %s205 = ssub.s32 1024, 1024
          %206 = vsyncadd %s199, %s205
          %s207 = smul.addr %s21, 8
          %s208 = sadd.s32 %s203, %s207
          %s209 = smul.addr %s208, 128
          %s210 = scalar_lea.hbm %s0, %s209
          %s211 = sshll.u32 %s202, 4
          %s212 = int_to_ptr.vmem [resolvable:$true] %s211
          %217 = dma.hbm_to_vmem [thread:$0]  %s210, 1024, %s212, %s199, 256, 256, 16
        $region36: #{tpu_custom_call.1} parent=31 // pred_fallthru
          _
      $region32: #{tpu_custom_call.1} parent=5 // pred_fallthru
        _
      %p218 = scmp.le.s32.totalorder 1, %s14
      %p219 = scmp.lt.s32.totalorder %s14, 3
      %p220 = pnand %p218, %p219
      %p221 = pneg %p220
      // Predicated region
      $region37: #{tpu_custom_call.1} parent=5 // pred_check
        _
      $region38: #{tpu_custom_call.1} parent=5 // pred_check_branch
        %223 = sbr.rel (%p220) target = $region40
      $region39: #{tpu_custom_call.1} parent=5 // pred_region
        %s224 = ssub.s32 %s14, 1
        %s225 = sand.u32 %s41, 1
        %s226 = scalar_lea.sflag [#allocation5], %s225
        %s227 = sand.u32 %s41, 1
        %s228 = smul.addr %s227, 64
        %s229 = scalar_lea.vmem [#allocation4], %s228
        // Predicated region
        $region41: #{tpu_custom_call.1} parent=39 // pred_check
          %p230 = pneg %p54
        $region42: #{tpu_custom_call.1} parent=39 // pred_check_branch
          %232 = sbr.rel (%p230) target = $region44
        $region43: #{tpu_custom_call.1} parent=39 // pred_region
          %233 = dma.done %s226, 1024
        $region44: #{tpu_custom_call.1} parent=39 // pred_fallthru
          _
        %s234 = sand.u32 %s41, 1
        %s235 = scalar_lea.sflag [#allocation5], %s234
        %s236 = sand.u32 %s41, 1
        %s237 = smul.addr %s236, 64
        %s238 = scalar_lea.vmem [#allocation4], %s237
        %p239 = pneg %p54
        %p240 = pneg %p51
        %p241 = pneg %p75
        %p242 = pneg %p72
        %p243 = pneg %p96
        %p244 = pneg %p93
        %p245 = pneg %p117
        %p246 = pneg %p114
        %p247 = pneg %p138
        %p248 = pneg %p135
        %p249 = pneg %p164
        %p250 = pneg %p161
        %p251 = scmp.lt.s32.totalorder %s23, 1
        %s252 = scalar_select %p251, %s23, 1
        %s253 = smul.addr %s252, 4
        %s254 = smul.addr %s253, 8
        %s255 = scalar_lea.vmem %s5, %s254
        %s256 = smul.u32 2, %s24
        %p257 = scmp.lt.s32.totalorder %s23, 1
        %s258 = scalar_select %p257, %s23, 1
        %s259 = smul.addr %s258, 4
        %s260 = smul.addr %s259, 8
        %s261 = scalar_lea.vmem %s5, %s260
        %p262 = scmp.eq.s32.totalorder %s24, 0
        // Predicated region
        $region45: #{tpu_custom_call.1} parent=39 // pred_check
          %p263 = pneg %p262
        $region46: #{tpu_custom_call.1} parent=39 // pred_check_branch
          %265 = sbr.rel (%p263) target = $region48
        $region47: #{tpu_custom_call.1} parent=39 // pred_region
          %266 = vst [vmem:[#allocation2] sm:$0xff] 0.0
          %267 = vst [vmem:[#allocation2 + $0x8] sm:$0xff] 0.0
          %268 = vst [vmem:[#allocation2 + $0x10] sm:$0xff] 0.0
          %269 = vst [vmem:[#allocation2 + $0x18] sm:$0xff] 0.0
          %270 = vst [vmem:[#allocation3] sm:$0xff] -inf
          %271 = vst [vmem:[#allocation3 + $0x8] sm:$0xff] -inf
          %272 = vst [vmem:[#allocation3 + $0x10] sm:$0xff] -inf
          %273 = vst [vmem:[#allocation3 + $0x18] sm:$0xff] -inf
        $region48: #{tpu_custom_call.1} parent=39 // pred_fallthru
          _
        %v274 = vld [vmem:[%s229] sm:$0xff]
        %v275 = vld [vmem:[%s229 + $0x10] sm:$0xff]
        %v276 = vld [vmem:[%s229 + $0x20] sm:$0xff]
        %v277 = vld [vmem:[%s229 + $0x30] sm:$0xff]
        %v278 = vadd.f32 %v274, 0.0
        %v279 = vadd.f32 %v275, 0.0
        %v280 = vadd.f32 %v276, 0.0
        %v281 = vadd.f32 %v277, 0.0
        %s282 = sadd.s32 0, 128
        %s283 = sshra.s32 %s282, 7
        %s284 = sand.u32 %s282, 127
        %s285 = smul.addr %s283, 8
        %s286 = scalar_lea.vmem %s229, %s285 [#allocation4]
        %v287 = vld [vmem:[%s286] sm:$0xff]
        %v288 = vld [vmem:[%s286 + $0x10] sm:$0xff]
        %v289 = vld [vmem:[%s286 + $0x20] sm:$0xff]
        %v290 = vld [vmem:[%s286 + $0x30] sm:$0xff]
        %v291 = vadd.f32 %v287, 0.0
        %v292 = vadd.f32 %v288, 0.0
        %v293 = vadd.f32 %v289, 0.0
        %v294 = vadd.f32 %v290, 0.0
        %v295 = vadd.f32 %v278, %v291
        %v296 = vadd.f32 %v279, %v292
        %v297 = vadd.f32 %v280, %v293
        %v298 = vadd.f32 %v281, %v294
        %v299 = vmax.f32 %v274, %v287
        %v300 = vmax.f32 %v275, %v288
        %v301 = vmax.f32 %v276, %v289
        %v302 = vmax.f32 %v277, %v290
        %v303 = vld [vmem:[#allocation2] sm:$0xff]
        %v304 = vld [vmem:[#allocation2 + $0x8] sm:$0xff]
        %v305 = vld [vmem:[#allocation2 + $0x10] sm:$0xff]
        %v306 = vld [vmem:[#allocation2 + $0x18] sm:$0xff]
        %v307 = vadd.f32 %v303, %v295
        %v308 = vadd.f32 %v304, %v296
        %v309 = vadd.f32 %v305, %v297
        %v310 = vadd.f32 %v306, %v298
        %311 = vst [vmem:[#allocation2] sm:$0xff] %v307
        %312 = vst [vmem:[#allocation2 + $0x8] sm:$0xff] %v308
        %313 = vst [vmem:[#allocation2 + $0x10] sm:$0xff] %v309
        %314 = vst [vmem:[#allocation2 + $0x18] sm:$0xff] %v310
        %v315 = vld [vmem:[#allocation3] sm:$0xff]
        %v316 = vld [vmem:[#allocation3 + $0x8] sm:$0xff]
        %v317 = vld [vmem:[#allocation3 + $0x10] sm:$0xff]
        %v318 = vld [vmem:[#allocation3 + $0x18] sm:$0xff]
        %v319 = vmax.f32 %v315, %v299
        %v320 = vmax.f32 %v316, %v300
        %v321 = vmax.f32 %v317, %v301
        %v322 = vmax.f32 %v318, %v302
        %323 = vst [vmem:[#allocation3] sm:$0xff] %v319
        %324 = vst [vmem:[#allocation3 + $0x8] sm:$0xff] %v320
        %325 = vst [vmem:[#allocation3 + $0x10] sm:$0xff] %v321
        %326 = vst [vmem:[#allocation3 + $0x18] sm:$0xff] %v322
        // Predicated region
        $region49: #{tpu_custom_call.1} parent=39 // pred_check
          %p327 = pneg %p262
        $region50: #{tpu_custom_call.1} parent=39 // pred_check_branch
          %329 = sbr.rel (%p327) target = $region52
        $region51: #{tpu_custom_call.1} parent=39 // pred_region
          %v330 = vld [vmem:[%s1] sm:$0xff]
          %v331 = vld [vmem:[%s1 + $0x8] sm:$0xff]
          %v332 = vld [vmem:[%s1 + $0x10] sm:$0xff]
          %v333 = vld [vmem:[%s1 + $0x18] sm:$0xff]
          %v334 = vld [vmem:[%s2] sm:$0x1]
          %v335 = vld [vmem:[%s3] sm:$0xff]
          %v336 = vld [vmem:[%s3 + $0x8] sm:$0xff]
          %v337 = vld [vmem:[%s3 + $0x10] sm:$0xff]
          %v338 = vld [vmem:[%s3 + $0x18] sm:$0xff]
          %v339 = vld [vmem:[%s4] sm:$0xff]
          %v340 = vld [vmem:[%s4 + $0x8] sm:$0xff]
          %v341 = vld [vmem:[%s4 + $0x10] sm:$0xff]
          %v342 = vld [vmem:[%s4 + $0x18] sm:$0xff]
          %v343 = vld [vmem:[#allocation2] sm:$0xff]
          %v344 = vld [vmem:[#allocation2 + $0x8] sm:$0xff]
          %v345 = vld [vmem:[#allocation2 + $0x10] sm:$0xff]
          %v346 = vld [vmem:[#allocation2 + $0x18] sm:$0xff]
          %347 = vadd.xlane.f32.xlu0 %v343
          %v348 = vpop.xlane.xlu0 %347
          %349 = vadd.xlane.f32.xlu0 %v344
          %v350 = vpop.xlane.xlu0 %349
          %351 = vadd.xlane.f32.xlu0 %v345
          %v352 = vpop.xlane.xlu0 %351
          %353 = vadd.xlane.f32.xlu0 %v346
          %v354 = vpop.xlane.xlu0 %353
          %v355 = vmul.f32 %v348, 0.00390625
          %v356 = vmul.f32 %v350, 0.00390625
          %v357 = vmul.f32 %v352, 0.00390625
          %v358 = vmul.f32 %v354, 0.00390625
          %v359 = vld [vmem:[#allocation3] sm:$0xff]
          %v360 = vld [vmem:[#allocation3 + $0x8] sm:$0xff]
          %v361 = vld [vmem:[#allocation3 + $0x10] sm:$0xff]
          %v362 = vld [vmem:[#allocation3 + $0x18] sm:$0xff]
          %363 = vmax.xlane.f32.xlu0 %v359
          %v364 = vpop.xlane.xlu0 %363
          %365 = vmax.xlane.f32.xlu0 %v360
          %v366 = vpop.xlane.xlu0 %365
          %367 = vmax.xlane.f32.xlu0 %v361
          %v368 = vpop.xlane.xlu0 %367
          %369 = vmax.xlane.f32.xlu0 %v362
          %v370 = vpop.xlane.xlu0 %369
          %v371 = vmul.f32 %v330, %v355
          %v372 = vmul.f32 %v331, %v356
          %v373 = vmul.f32 %v332, %v357
          %v374 = vmul.f32 %v333, %v358
          %vm375 = vcmask 15360
          %v376 = vsel %vm375, %v371, 0.0
          %v377 = vsel %vm375, %v372, 0.0
          %v378 = vadd.f32 %v376, %v377
          %v379 = vsel %vm375, %v373, 0.0
          %v380 = vadd.f32 %v378, %v379
          %v381 = vsel %vm375, %v374, 0.0
          %v382 = vadd.f32 %v380, %v381
          %v383 = vrot.slane %v382, 4
          %v384 = vadd.f32 %v382, %v383
          %v385 = vrot.slane %v384, 2
          %v386 = vadd.f32 %v384, %v385
          %v387 = vrot.slane %v386, 1
          %v388 = vadd.f32 %v386, %v387
          %v389 = vadd.f32 %v388, %v334
          %v390 = vmax.f32 %v389, 0.0
          %v391 = vlaneseq
          %v392 = vshrl.u32 %v391, 7
          %v393 = vsub.s32 0, %v392
          %v394 = vrot.slane %v390, %v393
          %v395 = vmul.f32 %v335, %v394
          %v396 = vmul.f32 %v336, %v394
          %v397 = vmul.f32 %v337, %v394
          %v398 = vmul.f32 %v338, %v394
          %v399 = vsel %vm375, %v395, 0.0
          %400 = vadd.xlane.f32.xlu0 %v399
          %v401 = vpop.xlane.xlu0 %400
          %v402 = vsel %vm375, %v396, 0.0
          %403 = vadd.xlane.f32.xlu0 %v402
          %v404 = vpop.xlane.xlu0 %403
          %v405 = vsel %vm375, %v397, 0.0
          %406 = vadd.xlane.f32.xlu0 %v405
          %v407 = vpop.xlane.xlu0 %406
          %v408 = vsel %vm375, %v398, 0.0
          %409 = vadd.xlane.f32.xlu0 %v408
          %v410 = vpop.xlane.xlu0 %409
          %v411 = vadd.f32 %v401, %v339
          %v412 = vadd.f32 %v404, %v340
          %v413 = vadd.f32 %v407, %v341
          %v414 = vadd.f32 %v410, %v342
          %v415 = vmul.f32 %v330, %v364
          %v416 = vmul.f32 %v331, %v366
          %v417 = vmul.f32 %v332, %v368
          %v418 = vmul.f32 %v333, %v370
          %v419 = vsel %vm375, %v415, 0.0
          %v420 = vsel %vm375, %v416, 0.0
          %v421 = vadd.f32 %v419, %v420
          %v422 = vsel %vm375, %v417, 0.0
          %v423 = vadd.f32 %v421, %v422
          %v424 = vsel %vm375, %v418, 0.0
          %v425 = vadd.f32 %v423, %v424
          %v426 = vrot.slane %v425, 4
          %v427 = vadd.f32 %v425, %v426
          %v428 = vrot.slane %v427, 2
          %v429 = vadd.f32 %v427, %v428
          %v430 = vrot.slane %v429, 1
          %v431 = vadd.f32 %v429, %v430
          %v432 = vadd.f32 %v431, %v334
          %v433 = vmax.f32 %v432, 0.0
          %v434 = vlaneseq
          %v435 = vshrl.u32 %v434, 7
          %v436 = vsub.s32 0, %v435
          %v437 = vrot.slane %v433, %v436
          %v438 = vmul.f32 %v335, %v437
          %v439 = vmul.f32 %v336, %v437
          %v440 = vmul.f32 %v337, %v437
          %v441 = vmul.f32 %v338, %v437
          %v442 = vsel %vm375, %v438, 0.0
          %443 = vadd.xlane.f32.xlu0 %v442
          %v444 = vpop.xlane.xlu0 %443
          %v445 = vsel %vm375, %v439, 0.0
          %446 = vadd.xlane.f32.xlu0 %v445
          %v447 = vpop.xlane.xlu0 %446
          %v448 = vsel %vm375, %v440, 0.0
          %449 = vadd.xlane.f32.xlu0 %v448
          %v450 = vpop.xlane.xlu0 %449
          %v451 = vsel %vm375, %v441, 0.0
          %452 = vadd.xlane.f32.xlu0 %v451
          %v453 = vpop.xlane.xlu0 %452
          %v454 = vadd.f32 %v444, %v339
          %v455 = vadd.f32 %v447, %v340
          %v456 = vadd.f32 %v450, %v341
          %v457 = vadd.f32 %v453, %v342
          %v458 = vadd.f32 %v411, %v454
          %v459 = vadd.f32 %v412, %v455
          %v460 = vadd.f32 %v413, %v456
          %v461 = vadd.f32 %v414, %v457
          %v462 = vxor.u32 %v458, 2147483648
          %v463 = vxor.u32 %v459, 2147483648
          %v464 = vxor.u32 %v460, 2147483648
          %v465 = vxor.u32 %v461, 2147483648
          %v466 = vmul.f32 %v462, 1.442695
          %v467 = vpow.pop %v466
          %v468 = vmul.f32 %v463, 1.442695
          %v469 = vpow.pop %v468
          %v470 = vmul.f32 %v464, 1.442695
          %v471 = vpow.pop %v470
          %v472 = vmul.f32 %v465, 1.442695
          %v473 = vpow.pop %v472
          %v474 = vadd.f32 %v467, 1.0
          %v475 = vadd.f32 %v469, 1.0
          %v476 = vadd.f32 %v471, 1.0
          %v477 = vadd.f32 %v473, 1.0
          %v478 = vrcp.pop %v474
          %v479 = vmul.f32 1.0, %v478
          %v480 = vrcp.pop %v475
          %v481 = vmul.f32 1.0, %v480
          %v482 = vrcp.pop %v476
          %v483 = vmul.f32 1.0, %v482
          %v484 = vrcp.pop %v477
          %v485 = vmul.f32 1.0, %v484
          %vm486 = vcmask 7168
          %487 = vst.msk [vmem:[%s261] sm:$0xff] %vm486, %v479
          %488 = vst.msk [vmem:[%s261 + $0x8] sm:$0xff] %vm486, %v481
          %489 = vst.msk [vmem:[%s261 + $0x10] sm:$0xff] %vm486, %v483
          %490 = vst.msk [vmem:[%s261 + $0x18] sm:$0xff] %vm486, %v485
        $region52: #{tpu_custom_call.1} parent=39 // pred_fallthru
          _
        %p491 = scmp.lt.s32.totalorder %s23, 1
        %s492 = scalar_select %p491, %s23, 1
        %s493 = smul.addr %s492, 4
        %s494 = smul.addr %s493, 8
        %s495 = scalar_lea.vmem %s5, %s494
        // Predicated region
        $region53: #{tpu_custom_call.1} parent=39 // pred_check
          %p496 = pneg %p161
        $region54: #{tpu_custom_call.1} parent=39 // pred_check_branch
          %498 = sbr.rel (%p496) target = $region56
        $region55: #{tpu_custom_call.1} parent=39 // pred_region
          _
        $region56: #{tpu_custom_call.1} parent=39 // pred_fallthru
          _
      $region40: #{tpu_custom_call.1} parent=5 // pred_fallthru
        _
      %p499 = scmp.le.s32.totalorder 2, %s14
      // Predicated region
      $region57: #{tpu_custom_call.1} parent=5 // pred_check
        %p500 = pneg %p499
      $region58: #{tpu_custom_call.1} parent=5 // pred_check_branch
        %502 = sbr.rel (%p500) target = $region60
      $region59: #{tpu_custom_call.1} parent=5 // pred_region
        %s503 = ssub.s32 %s14, 2
        // Predicated region
        $region61: #{tpu_custom_call.1} parent=59 // pred_check
          %p504 = pneg %p167
        $region62: #{tpu_custom_call.1} parent=59 // pred_check_branch
          %506 = sbr.rel (%p504) target = $region64
        $region63: #{tpu_custom_call.1} parent=59 // pred_region
          %p507 = scmp.lt.s32.totalorder %s25, 1
          %s508 = scalar_select %p507, %s25, 1
          %s509 = smul.addr %s508, 4
          %s510 = smul.addr %s509, 8
          %s511 = scalar_lea.vmem %s5, %s510
        $region64: #{tpu_custom_call.1} parent=59 // pred_fallthru
          _
      $region60: #{tpu_custom_call.1} parent=5 // pred_fallthru
        _
    $region6: #{tpu_custom_call.1} parent=1 // loop_footer
      %s18 = sadd.s32 1, %s14
    $region7: #{tpu_custom_call.1} parent=1 // loop_footer_branch
      %13 = sbr.rel target = $region3
    $region8: #{tpu_custom_call.1} parent=1 // loop_exit
      _
    %512 = vsyncpa [#allocation5], 1
    %s513 = scalar_lea.sflag [#allocation5], 1
    %514 = vsyncpa %s513, 1

</llo_original>
